<compile_context>
chip_gen: v5e
topology: v5e:2x2
jax: 0.10.0
libtpu: 0.0.40
codegen_flags: <defaults>
</compile_context>

<pallas_src>
import functools

import jax
import jax.numpy as jnp
from jax.experimental import pallas as pl
from jax.experimental.pallas import tpu as pltpu

EDGE_WEIGHT = 0.5
_F32_MAX = float(jnp.finfo(jnp.float32).max)


def _edge_bce_kernel(pred_ref, target_ref, out_ref, stat_ref, acc_ref, *,
                     H, W, scale):
    """Grid = (phase, tile). Phase 0: global min/max of both Sobel edge maps.
    Phase 1: fused min-max-normalize + BCE partial sums. Scalar state lives in
    SMEM scratch that persists across grid steps."""
    phase = pl.program_id(0)
    tile = pl.program_id(1)
    n_tiles = pl.num_programs(1)

    x_p = pred_ref[...]          # (tile_rows, W) f32, tile_rows = tile_n * H
    x_t = target_ref[...]
    rows = x_p.shape[0]

    # Border masks reproducing conv2d(padding=1) zero padding. Row index is
    # taken modulo H so image boundaries inside a multi-image tile (and the
    # roll wrap-around) are zeroed too. Computed once, reused for both inputs.
    row_in_img = jax.lax.broadcasted_iota(jnp.int32, x_p.shape, 0) % H
    col = jax.lax.broadcasted_iota(jnp.int32, x_p.shape, 1)
    top = row_in_img == 0
    bot = row_in_img == H - 1
    lft = col == 0
    rgt = col == W - 1

    # Halo shifts on the XLU (pltpu.roll, jnp.roll semantics) + VPU select.
    def up(a):      # a[i-1, j], zero outside the image
        return jnp.where(top, 0.0, pltpu.roll(a, 1, 0))

    def down(a):    # a[i+1, j]
        return jnp.where(bot, 0.0, pltpu.roll(a, rows - 1, 0))

    def left(a):    # a[i, j-1]
        return jnp.where(lft, 0.0, pltpu.roll(a, 1, 1))

    def right(a):   # a[i, j+1]
        return jnp.where(rgt, 0.0, pltpu.roll(a, W - 1, 1))

    def sobel_edges(x):
        # Separable Sobel in cross-correlation order (== F.conv2d):
        #   gx = [-1,0,1] along W applied to the [1,2,1]^T H-smooth,
        #   gy = [-1,0,1]^T along H applied to the [1,2,1] W-smooth.
        sy = up(x) + 2.0 * x + down(x)
        sx = left(x) + 2.0 * x + right(x)
        gx = right(sy) - left(sy)
        gy = down(sx) - up(sx)
        return jnp.sqrt(gx * gx + gy * gy + 1e-6)

    pe = sobel_edges(x_p)
    te = sobel_edges(x_t)

    @pl.when(jnp.logical_and(phase == 0, tile == 0))
    def _init():
        stat_ref[0] = jnp.float32(_F32_MAX)    # pred edges min
        stat_ref[1] = jnp.float32(-_F32_MAX)   # pred edges max
        stat_ref[2] = jnp.float32(_F32_MAX)    # target edges min
        stat_ref[3] = jnp.float32(-_F32_MAX)   # target edges max
        acc_ref[0] = jnp.float32(0.0)

    @pl.when(phase == 0)
    def _minmax():
        stat_ref[0] = jnp.minimum(stat_ref[0], jnp.min(pe))
        stat_ref[1] = jnp.maximum(stat_ref[1], jnp.max(pe))
        stat_ref[2] = jnp.minimum(stat_ref[2], jnp.min(te))
        stat_ref[3] = jnp.maximum(stat_ref[3], jnp.max(te))

    @pl.when(phase == 1)
    def _bce():
        # Hoisted scalar normalization (one divide per edge map, broadcast
        # multiply per element) + fused BCE -> running scalar sum.
        p_min = stat_ref[0]
        p_inv = 1.0 / (stat_ref[1] - p_min + 1e-6)
        t_min = stat_ref[2]
        t_inv = 1.0 / (stat_ref[3] - t_min + 1e-6)

        p = (pe - p_min) * p_inv
        t = (te - t_min) * t_inv
        log_p = jnp.maximum(jnp.log(p), -100.0)          # torch BCE log clamp
        log_1mp = jnp.maximum(jnp.log(1.0 - p), -100.0)
        tile_sum = jnp.sum(-(t * log_p + (1.0 - t) * log_1mp))

        total = acc_ref[0] + tile_sum
        acc_ref[0] = total

        @pl.when(tile == n_tiles - 1)
        def _finalize():
            # scale = edge_weight / (N*H*W), folded into one multiply.
            out_ref[0, 0] = scale * total


def edge_aware_loss(pred, target, edge_weight=EDGE_WEIGHT):
    """pred, target: (N, 1, H, W) float32 (NCHW, like the PyTorch module)."""
    N, C, H, W = pred.shape
    assert C == 1, "EdgeAwareLoss Sobel kernels are single-channel"

    # Glue only: squeeze channel + flatten (N, H) onto the sublane axis so W
    # maps to lanes. No host-side padding (halo handled in-kernel).
    p2 = pred[:, 0, :, :].astype(jnp.float32).reshape(N * H, W)
    t2 = target[:, 0, :, :].astype(jnp.float32).reshape(N * H, W)

    # Tile over whole images so the H halo never crosses a block boundary.
    # Largest images-per-tile whose input block fits the budget and keeps the
    # sublane dim a multiple of 8 (BlockSpec constraint for partial blocks).
    img_bytes = H * W * 4
    budget_bytes = 4 * 1024 * 1024
    tile_n = N
    for d in range(N, 0, -1):
        if N % d == 0 and d * img_bytes <= budget_bytes and (d * H) % 8 == 0:
            tile_n = d
            break
    if (tile_n * H) % 8 != 0:
        tile_n = N   # single full-extent block is always legal
    n_tiles = N // tile_n
    tile_rows = tile_n * H

    scale = float(edge_weight) / float(N * H * W)
    kernel = functools.partial(_edge_bce_kernel, H=H, W=W, scale=scale)

    # VMEM: 2 inputs x 2 pipeline buffers x tile + headroom for intermediates.
    tile_bytes = tile_rows * W * 4
    vmem_limit = int(min(96 * 2**20, max(4 * 2**20, 32 * tile_bytes)))

    in_spec = pl.BlockSpec((tile_rows, W), lambda ph, t: (t, 0))
    out = pl.pallas_call(
        kernel,
        out_shape=jax.ShapeDtypeStruct((1, 1), jnp.float32),
        grid=(2, n_tiles),    # (phase, tile); tile is the fast axis
        in_specs=[in_spec, in_spec],
        out_specs=pl.BlockSpec((1, 1), lambda ph, t: (0, 0),
                               memory_space=pltpu.MemorySpace.SMEM),
        scratch_shapes=[pltpu.SMEM((4,), jnp.float32),   # min/max stats
                        pltpu.SMEM((1,), jnp.float32)],  # BCE running sum
        compiler_params=pltpu.CompilerParams(
            # Both axes carry reductions through SMEM scratch -> "arbitrary".
            # TODO(synk): v7x dual-TC sharding needs per-core partial min/max
            # and sums combined in a final step; kept single-core here.
            dimension_semantics=("arbitrary", "arbitrary"),
            vmem_limit_bytes=vmem_limit,
        ),
    )(p2, t2)
    return out[0, 0]


def edge_aware_loss_ref(pred, target, edge_weight=EDGE_WEIGHT):
    """Pure-JAX, exact-f32 reference mirroring the PyTorch forward."""
    kx = ((-1.0, 0.0, 1.0), (-2.0, 0.0, 2.0), (-1.0, 0.0, 1.0))
    ky = ((-1.0, -2.0, -1.0), (0.0, 0.0, 0.0), (1.0, 2.0, 1.0))

    def conv3x3(x, k):   # x: (N, H, W); cross-correlation, zero padding=1
        H, W = x.shape[1], x.shape[2]
        xp = jnp.pad(x, ((0, 0), (1, 1), (1, 1)))
        out = jnp.zeros_like(x)
        for di in range(3):
            for dj in range(3):
                c = k[di][dj]
                if c != 0.0:
                    out = out + c * xp[:, di:di + H, dj:dj + W]
        return out

    def edges(x):
        gx = conv3x3(x, kx)
        gy = conv3x3(x, ky)
        return jnp.sqrt(gx * gx + gy * gy + 1e-6)

    def norm(e):
        return (e - e.min()) / (e.max() - e.min() + 1e-6)

    p = norm(edges(pred[:, 0].astype(jnp.float32)))
    t = norm(edges(target[:, 0].astype(jnp.float32)))
    log_p = jnp.maximum(jnp.log(p), -100.0)
    log_1mp = jnp.maximum(jnp.log(1.0 - p), -100.0)
    return edge_weight * jnp.mean(-(t * log_p + (1.0 - t) * log_1mp))


if __name__ == "__main__":
    key = jax.random.PRNGKey(0)
    k1, k2 = jax.random.split(key)
    # Shapes consistent with the module: N=2, C=1, H=W=16.
    pred = jax.nn.sigmoid(jax.random.normal(k1, (2, 1, 16, 16), jnp.float32))
    target = jax.nn.sigmoid(jax.random.normal(k2, (2, 1, 16, 16), jnp.float32))

    loss = jax.block_until_ready(edge_aware_loss(pred, target))
    ref = jax.block_until_ready(edge_aware_loss_ref(pred, target))

    assert jnp.isfinite(loss), f"non-finite loss: {loss}"
    assert jnp.allclose(loss, ref, rtol=1e-4, atol=1e-5), (loss, ref)
    print("KERNEL_OK")
</pallas_src>

<mosaic_0001>
module attributes {stable_mosaic.version = 11 : i64} {
  func.func @_edge_bce_kernel(%arg0: i32, %arg1: i32, %arg2: memref<32x16xf32, #tpu.memory_space<vmem>>, %arg3: memref<32x16xf32, #tpu.memory_space<vmem>>, %arg4: memref<1x1xf32, #tpu.memory_space<smem>>, %arg5: memref<4xf32, #tpu.memory_space<smem>>, %arg6: memref<1xf32, #tpu.memory_space<smem>>) attributes {dimension_semantics = [#tpu.dimension_semantics<arbitrary>, #tpu.dimension_semantics<arbitrary>], iteration_bounds = array<i64: 2, 1>, scalar_prefetch = 0 : i64, scratch_operands = 2 : i64, tpu.core_type = #tpu.core_type<tc>, window_params = [{transform_indices = @transform_0, window_bounds = array<i64: 32, 16>}, {transform_indices = @transform_1, window_bounds = array<i64: 32, 16>}, {transform_indices = @transform_2, window_bounds = array<i64: 1, 1>}]} {
    %c0 = arith.constant 0 : index
    %c0_0 = arith.constant 0 : index
    %0 = vector.load %arg2[%c0, %c0_0] : memref<32x16xf32, #tpu.memory_space<vmem>>, vector<32x16xf32>
    %c0_1 = arith.constant 0 : index
    %c0_2 = arith.constant 0 : index
    %1 = vector.load %arg3[%c0_1, %c0_2] : memref<32x16xf32, #tpu.memory_space<vmem>>, vector<32x16xf32>
    %2 = tpu.iota {dimensions = array<i32: 0>} : vector<32x16xi32>
    %c16_i32 = arith.constant 16 : i32
    %c0_i32 = arith.constant 0 : i32
    %3 = arith.cmpi eq, %c16_i32, %c0_i32 : i32
    %c1_i32 = arith.constant 1 : i32
    %4 = arith.select %3, %c1_i32, %c16_i32 : i32
    %5 = vector.broadcast %4 : i32 to vector<32x16xi32>
    %6 = arith.remsi %2, %5 : vector<32x16xi32>
    %c0_i32_3 = arith.constant 0 : i32
    %7 = vector.broadcast %c0_i32_3 : i32 to vector<32x16xi32>
    %8 = arith.cmpi ne, %6, %7 : vector<32x16xi32>
    %c0_i32_4 = arith.constant 0 : i32
    %9 = vector.broadcast %c0_i32_4 : i32 to vector<32x16xi32>
    %10 = arith.cmpi slt, %6, %9 : vector<32x16xi32>
    %c0_i32_5 = arith.constant 0 : i32
    %11 = arith.cmpi slt, %4, %c0_i32_5 : i32
    %12 = vector.broadcast %11 : i1 to vector<32x16xi1>
    %13 = vector.broadcast %12 : vector<32x16xi1> to vector<32x16xi1>
    %14 = arith.xori %10, %13 : vector<32x16xi1>
    %15 = arith.andi %14, %8 : vector<32x16xi1>
    %16 = vector.broadcast %4 : i32 to vector<32x16xi32>
    %17 = arith.addi %6, %16 : vector<32x16xi32>
    %18 = arith.select %15, %17, %6 : vector<32x16xi1>, vector<32x16xi32>
    %19 = tpu.iota {dimensions = array<i32: 1>} : vector<32x16xi32>
    %c0_i32_6 = arith.constant 0 : i32
    %20 = vector.broadcast %c0_i32_6 : i32 to vector<32x16xi32>
    %21 = arith.cmpi eq, %18, %20 : vector<32x16xi32>
    %c15_i32 = arith.constant 15 : i32
    %22 = vector.broadcast %c15_i32 : i32 to vector<32x16xi32>
    %23 = arith.cmpi eq, %18, %22 : vector<32x16xi32>
    %c0_i32_7 = arith.constant 0 : i32
    %24 = vector.broadcast %c0_i32_7 : i32 to vector<32x16xi32>
    %25 = arith.cmpi eq, %19, %24 : vector<32x16xi32>
    %c15_i32_8 = arith.constant 15 : i32
    %26 = vector.broadcast %c15_i32_8 : i32 to vector<32x16xi32>
    %27 = arith.cmpi eq, %19, %26 : vector<32x16xi32>
    %c1_i32_9 = arith.constant 1 : i32
    %28 = tpu.dynamic_rotate %0 by %c1_i32_9 dim 0 : vector<32x16xf32>, i32 -> vector<32x16xf32>
    %cst = arith.constant 0.000000e+00 : f32
    %29 = vector.broadcast %cst : f32 to vector<32x16xf32>
    %30 = arith.select %21, %29, %28 : vector<32x16xi1>, vector<32x16xf32>
    %cst_10 = arith.constant 2.000000e+00 : f32
    %31 = vector.broadcast %cst_10 : f32 to vector<32x16xf32>
    %32 = arith.mulf %31, %0 : vector<32x16xf32>
    %33 = arith.addf %30, %32 : vector<32x16xf32>
    %c31_i32 = arith.constant 31 : i32
    %34 = tpu.dynamic_rotate %0 by %c31_i32 dim 0 : vector<32x16xf32>, i32 -> vector<32x16xf32>
    %cst_11 = arith.constant 0.000000e+00 : f32
    %35 = vector.broadcast %cst_11 : f32 to vector<32x16xf32>
    %36 = arith.select %23, %35, %34 : vector<32x16xi1>, vector<32x16xf32>
    %37 = arith.addf %33, %36 : vector<32x16xf32>
    %c1_i32_12 = arith.constant 1 : i32
    %38 = tpu.dynamic_rotate %0 by %c1_i32_12 dim 1 : vector<32x16xf32>, i32 -> vector<32x16xf32>
    %cst_13 = arith.constant 0.000000e+00 : f32
    %39 = vector.broadcast %cst_13 : f32 to vector<32x16xf32>
    %40 = arith.select %25, %39, %38 : vector<32x16xi1>, vector<32x16xf32>
    %cst_14 = arith.constant 2.000000e+00 : f32
    %41 = vector.broadcast %cst_14 : f32 to vector<32x16xf32>
    %42 = arith.mulf %41, %0 : vector<32x16xf32>
    %43 = arith.addf %40, %42 : vector<32x16xf32>
    %c15_i32_15 = arith.constant 15 : i32
    %44 = tpu.dynamic_rotate %0 by %c15_i32_15 dim 1 : vector<32x16xf32>, i32 -> vector<32x16xf32>
    %cst_16 = arith.constant 0.000000e+00 : f32
    %45 = vector.broadcast %cst_16 : f32 to vector<32x16xf32>
    %46 = arith.select %27, %45, %44 : vector<32x16xi1>, vector<32x16xf32>
    %47 = arith.addf %43, %46 : vector<32x16xf32>
    %c15_i32_17 = arith.constant 15 : i32
    %48 = tpu.dynamic_rotate %37 by %c15_i32_17 dim 1 : vector<32x16xf32>, i32 -> vector<32x16xf32>
    %cst_18 = arith.constant 0.000000e+00 : f32
    %49 = vector.broadcast %cst_18 : f32 to vector<32x16xf32>
    %50 = arith.select %27, %49, %48 : vector<32x16xi1>, vector<32x16xf32>
    %c1_i32_19 = arith.constant 1 : i32
    %51 = tpu.dynamic_rotate %37 by %c1_i32_19 dim 1 : vector<32x16xf32>, i32 -> vector<32x16xf32>
    %cst_20 = arith.constant 0.000000e+00 : f32
    %52 = vector.broadcast %cst_20 : f32 to vector<32x16xf32>
    %53 = arith.select %25, %52, %51 : vector<32x16xi1>, vector<32x16xf32>
    %54 = arith.subf %50, %53 : vector<32x16xf32>
    %c31_i32_21 = arith.constant 31 : i32
    %55 = tpu.dynamic_rotate %47 by %c31_i32_21 dim 0 : vector<32x16xf32>, i32 -> vector<32x16xf32>
    %cst_22 = arith.constant 0.000000e+00 : f32
    %56 = vector.broadcast %cst_22 : f32 to vector<32x16xf32>
    %57 = arith.select %23, %56, %55 : vector<32x16xi1>, vector<32x16xf32>
    %c1_i32_23 = arith.constant 1 : i32
    %58 = tpu.dynamic_rotate %47 by %c1_i32_23 dim 0 : vector<32x16xf32>, i32 -> vector<32x16xf32>
    %cst_24 = arith.constant 0.000000e+00 : f32
    %59 = vector.broadcast %cst_24 : f32 to vector<32x16xf32>
    %60 = arith.select %21, %59, %58 : vector<32x16xi1>, vector<32x16xf32>
    %61 = arith.subf %57, %60 : vector<32x16xf32>
    %62 = arith.mulf %54, %54 : vector<32x16xf32>
    %63 = arith.mulf %61, %61 : vector<32x16xf32>
    %64 = arith.addf %62, %63 : vector<32x16xf32>
    %cst_25 = arith.constant 9.99999997E-7 : f32
    %65 = vector.broadcast %cst_25 : f32 to vector<32x16xf32>
    %66 = arith.addf %64, %65 : vector<32x16xf32>
    %67 = math.sqrt %66 : vector<32x16xf32>
    %c1_i32_26 = arith.constant 1 : i32
    %68 = tpu.dynamic_rotate %1 by %c1_i32_26 dim 0 : vector<32x16xf32>, i32 -> vector<32x16xf32>
    %cst_27 = arith.constant 0.000000e+00 : f32
    %69 = vector.broadcast %cst_27 : f32 to vector<32x16xf32>
    %70 = arith.select %21, %69, %68 : vector<32x16xi1>, vector<32x16xf32>
    %cst_28 = arith.constant 2.000000e+00 : f32
    %71 = vector.broadcast %cst_28 : f32 to vector<32x16xf32>
    %72 = arith.mulf %71, %1 : vector<32x16xf32>
    %73 = arith.addf %70, %72 : vector<32x16xf32>
    %c31_i32_29 = arith.constant 31 : i32
    %74 = tpu.dynamic_rotate %1 by %c31_i32_29 dim 0 : vector<32x16xf32>, i32 -> vector<32x16xf32>
    %cst_30 = arith.constant 0.000000e+00 : f32
    %75 = vector.broadcast %cst_30 : f32 to vector<32x16xf32>
    %76 = arith.select %23, %75, %74 : vector<32x16xi1>, vector<32x16xf32>
    %77 = arith.addf %73, %76 : vector<32x16xf32>
    %c1_i32_31 = arith.constant 1 : i32
    %78 = tpu.dynamic_rotate %1 by %c1_i32_31 dim 1 : vector<32x16xf32>, i32 -> vector<32x16xf32>
    %cst_32 = arith.constant 0.000000e+00 : f32
    %79 = vector.broadcast %cst_32 : f32 to vector<32x16xf32>
    %80 = arith.select %25, %79, %78 : vector<32x16xi1>, vector<32x16xf32>
    %cst_33 = arith.constant 2.000000e+00 : f32
    %81 = vector.broadcast %cst_33 : f32 to vector<32x16xf32>
    %82 = arith.mulf %81, %1 : vector<32x16xf32>
    %83 = arith.addf %80, %82 : vector<32x16xf32>
    %c15_i32_34 = arith.constant 15 : i32
    %84 = tpu.dynamic_rotate %1 by %c15_i32_34 dim 1 : vector<32x16xf32>, i32 -> vector<32x16xf32>
    %cst_35 = arith.constant 0.000000e+00 : f32
    %85 = vector.broadcast %cst_35 : f32 to vector<32x16xf32>
    %86 = arith.select %27, %85, %84 : vector<32x16xi1>, vector<32x16xf32>
    %87 = arith.addf %83, %86 : vector<32x16xf32>
    %c15_i32_36 = arith.constant 15 : i32
    %88 = tpu.dynamic_rotate %77 by %c15_i32_36 dim 1 : vector<32x16xf32>, i32 -> vector<32x16xf32>
    %cst_37 = arith.constant 0.000000e+00 : f32
    %89 = vector.broadcast %cst_37 : f32 to vector<32x16xf32>
    %90 = arith.select %27, %89, %88 : vector<32x16xi1>, vector<32x16xf32>
    %c1_i32_38 = arith.constant 1 : i32
    %91 = tpu.dynamic_rotate %77 by %c1_i32_38 dim 1 : vector<32x16xf32>, i32 -> vector<32x16xf32>
    %cst_39 = arith.constant 0.000000e+00 : f32
    %92 = vector.broadcast %cst_39 : f32 to vector<32x16xf32>
    %93 = arith.select %25, %92, %91 : vector<32x16xi1>, vector<32x16xf32>
    %94 = arith.subf %90, %93 : vector<32x16xf32>
    %c31_i32_40 = arith.constant 31 : i32
    %95 = tpu.dynamic_rotate %87 by %c31_i32_40 dim 0 : vector<32x16xf32>, i32 -> vector<32x16xf32>
    %cst_41 = arith.constant 0.000000e+00 : f32
    %96 = vector.broadcast %cst_41 : f32 to vector<32x16xf32>
    %97 = arith.select %23, %96, %95 : vector<32x16xi1>, vector<32x16xf32>
    %c1_i32_42 = arith.constant 1 : i32
    %98 = tpu.dynamic_rotate %87 by %c1_i32_42 dim 0 : vector<32x16xf32>, i32 -> vector<32x16xf32>
    %cst_43 = arith.constant 0.000000e+00 : f32
    %99 = vector.broadcast %cst_43 : f32 to vector<32x16xf32>
    %100 = arith.select %21, %99, %98 : vector<32x16xi1>, vector<32x16xf32>
    %101 = arith.subf %97, %100 : vector<32x16xf32>
    %102 = arith.mulf %94, %94 : vector<32x16xf32>
    %103 = arith.mulf %101, %101 : vector<32x16xf32>
    %104 = arith.addf %102, %103 : vector<32x16xf32>
    %cst_44 = arith.constant 9.99999997E-7 : f32
    %105 = vector.broadcast %cst_44 : f32 to vector<32x16xf32>
    %106 = arith.addf %104, %105 : vector<32x16xf32>
    %107 = math.sqrt %106 : vector<32x16xf32>
    %c0_i32_45 = arith.constant 0 : i32
    %108 = arith.cmpi eq, %arg0, %c0_i32_45 : i32
    %c0_i32_46 = arith.constant 0 : i32
    %109 = arith.cmpi eq, %arg1, %c0_i32_46 : i32
    %110 = arith.andi %108, %109 : i1
    %111 = arith.extui %110 : i1 to i32
    %c0_i32_47 = arith.constant 0 : i32
    %112 = arith.cmpi ne, %111, %c0_i32_47 : i32
    scf.if %112 {
      %cst_52 = arith.constant 3.40282347E+38 : f32
      %c0_53 = arith.constant 0 : index
      %119 = memref.load %arg5[%c0_53] : memref<4xf32, #tpu.memory_space<smem>>
      memref.store %cst_52, %arg5[%c0_53] : memref<4xf32, #tpu.memory_space<smem>>
      %cst_54 = arith.constant -3.40282347E+38 : f32
      %c1 = arith.constant 1 : index
      %120 = memref.load %arg5[%c1] : memref<4xf32, #tpu.memory_space<smem>>
      memref.store %cst_54, %arg5[%c1] : memref<4xf32, #tpu.memory_space<smem>>
      %cst_55 = arith.constant 3.40282347E+38 : f32
      %c2 = arith.constant 2 : index
      %121 = memref.load %arg5[%c2] : memref<4xf32, #tpu.memory_space<smem>>
      memref.store %cst_55, %arg5[%c2] : memref<4xf32, #tpu.memory_space<smem>>
      %cst_56 = arith.constant -3.40282347E+38 : f32
      %c3 = arith.constant 3 : index
      %122 = memref.load %arg5[%c3] : memref<4xf32, #tpu.memory_space<smem>>
      memref.store %cst_56, %arg5[%c3] : memref<4xf32, #tpu.memory_space<smem>>
      %cst_57 = arith.constant 0.000000e+00 : f32
      %c0_58 = arith.constant 0 : index
      %123 = memref.load %arg6[%c0_58] : memref<1xf32, #tpu.memory_space<smem>>
      memref.store %cst_57, %arg6[%c0_58] : memref<1xf32, #tpu.memory_space<smem>>
    } else {
    }
    %c0_i32_48 = arith.constant 0 : i32
    %113 = arith.cmpi eq, %arg0, %c0_i32_48 : i32
    %114 = arith.extui %113 : i1 to i32
    %c0_i32_49 = arith.constant 0 : i32
    %115 = arith.cmpi ne, %114, %c0_i32_49 : i32
    scf.if %115 {
      %c0_52 = arith.constant 0 : index
      %119 = memref.load %arg5[%c0_52] : memref<4xf32, #tpu.memory_space<smem>>
      %120 = vector.shape_cast %67 : vector<32x16xf32> to vector<1x32x16xf32>
      %cst_53 = arith.constant dense<0x7F800000> : vector<1xf32>
      %121 = vector.multi_reduction <minimumf>, %120, %cst_53 [1, 2] : vector<1x32x16xf32> to vector<1xf32>
      %122 = vector.shape_cast %121 : vector<1xf32> to vector<1x1x1xf32>
      %123 = vector.extract %122[0, 0, 0] : f32 from vector<1x1x1xf32>
      %124 = arith.minimumf %119, %123 : f32
      %c0_54 = arith.constant 0 : index
      %125 = memref.load %arg5[%c0_54] : memref<4xf32, #tpu.memory_space<smem>>
      memref.store %124, %arg5[%c0_54] : memref<4xf32, #tpu.memory_space<smem>>
      %c1 = arith.constant 1 : index
      %126 = memref.load %arg5[%c1] : memref<4xf32, #tpu.memory_space<smem>>
      %127 = vector.shape_cast %67 : vector<32x16xf32> to vector<1x32x16xf32>
      %cst_55 = arith.constant dense<0xFF800000> : vector<1xf32>
      %128 = vector.multi_reduction <maximumf>, %127, %cst_55 [1, 2] : vector<1x32x16xf32> to vector<1xf32>
      %129 = vector.shape_cast %128 : vector<1xf32> to vector<1x1x1xf32>
      %130 = vector.extract %129[0, 0, 0] : f32 from vector<1x1x1xf32>
      %131 = arith.maximumf %126, %130 : f32
      %c1_56 = arith.constant 1 : index
      %132 = memref.load %arg5[%c1_56] : memref<4xf32, #tpu.memory_space<smem>>
      memref.store %131, %arg5[%c1_56] : memref<4xf32, #tpu.memory_space<smem>>
      %c2 = arith.constant 2 : index
      %133 = memref.load %arg5[%c2] : memref<4xf32, #tpu.memory_space<smem>>
      %134 = vector.shape_cast %107 : vector<32x16xf32> to vector<1x32x16xf32>
      %cst_57 = arith.constant dense<0x7F800000> : vector<1xf32>
      %135 = vector.multi_reduction <minimumf>, %134, %cst_57 [1, 2] : vector<1x32x16xf32> to vector<1xf32>
      %136 = vector.shape_cast %135 : vector<1xf32> to vector<1x1x1xf32>
      %137 = vector.extract %136[0, 0, 0] : f32 from vector<1x1x1xf32>
      %138 = arith.minimumf %133, %137 : f32
      %c2_58 = arith.constant 2 : index
      %139 = memref.load %arg5[%c2_58] : memref<4xf32, #tpu.memory_space<smem>>
      memref.store %138, %arg5[%c2_58] : memref<4xf32, #tpu.memory_space<smem>>
      %c3 = arith.constant 3 : index
      %140 = memref.load %arg5[%c3] : memref<4xf32, #tpu.memory_space<smem>>
      %141 = vector.shape_cast %107 : vector<32x16xf32> to vector<1x32x16xf32>
      %cst_59 = arith.constant dense<0xFF800000> : vector<1xf32>
      %142 = vector.multi_reduction <maximumf>, %141, %cst_59 [1, 2] : vector<1x32x16xf32> to vector<1xf32>
      %143 = vector.shape_cast %142 : vector<1xf32> to vector<1x1x1xf32>
      %144 = vector.extract %143[0, 0, 0] : f32 from vector<1x1x1xf32>
      %145 = arith.maximumf %140, %144 : f32
      %c3_60 = arith.constant 3 : index
      %146 = memref.load %arg5[%c3_60] : memref<4xf32, #tpu.memory_space<smem>>
      memref.store %145, %arg5[%c3_60] : memref<4xf32, #tpu.memory_space<smem>>
    } else {
    }
    %c1_i32_50 = arith.constant 1 : i32
    %116 = arith.cmpi eq, %arg0, %c1_i32_50 : i32
    %117 = arith.extui %116 : i1 to i32
    %c0_i32_51 = arith.constant 0 : i32
    %118 = arith.cmpi ne, %117, %c0_i32_51 : i32
    scf.if %118 {
      %c0_52 = arith.constant 0 : index
      %119 = memref.load %arg5[%c0_52] : memref<4xf32, #tpu.memory_space<smem>>
      %c1 = arith.constant 1 : index
      %120 = memref.load %arg5[%c1] : memref<4xf32, #tpu.memory_space<smem>>
      %121 = arith.subf %120, %119 : f32
      %cst_53 = arith.constant 9.99999997E-7 : f32
      %122 = arith.addf %121, %cst_53 : f32
      %cst_54 = arith.constant 1.000000e+00 : f32
      %123 = arith.divf %cst_54, %122 : f32
      %c2 = arith.constant 2 : index
      %124 = memref.load %arg5[%c2] : memref<4xf32, #tpu.memory_space<smem>>
      %c3 = arith.constant 3 : index
      %125 = memref.load %arg5[%c3] : memref<4xf32, #tpu.memory_space<smem>>
      %126 = arith.subf %125, %124 : f32
      %cst_55 = arith.constant 9.99999997E-7 : f32
      %127 = arith.addf %126, %cst_55 : f32
      %cst_56 = arith.constant 1.000000e+00 : f32
      %128 = arith.divf %cst_56, %127 : f32
      %129 = vector.broadcast %119 : f32 to vector<32x16xf32>
      %130 = arith.subf %67, %129 : vector<32x16xf32>
      %131 = vector.broadcast %123 : f32 to vector<32x16xf32>
      %132 = arith.mulf %130, %131 : vector<32x16xf32>
      %133 = vector.broadcast %124 : f32 to vector<32x16xf32>
      %134 = arith.subf %107, %133 : vector<32x16xf32>
      %135 = vector.broadcast %128 : f32 to vector<32x16xf32>
      %136 = arith.mulf %134, %135 : vector<32x16xf32>
      %137 = math.log %132 : vector<32x16xf32>
      %cst_57 = arith.constant -1.000000e+02 : f32
      %138 = vector.broadcast %cst_57 : f32 to vector<32x16xf32>
      %139 = arith.maximumf %137, %138 : vector<32x16xf32>
      %cst_58 = arith.constant 1.000000e+00 : f32
      %140 = vector.broadcast %cst_58 : f32 to vector<32x16xf32>
      %141 = arith.subf %140, %132 : vector<32x16xf32>
      %142 = math.log %141 : vector<32x16xf32>
      %cst_59 = arith.constant -1.000000e+02 : f32
      %143 = vector.broadcast %cst_59 : f32 to vector<32x16xf32>
      %144 = arith.maximumf %142, %143 : vector<32x16xf32>
      %145 = arith.mulf %136, %139 : vector<32x16xf32>
      %cst_60 = arith.constant 1.000000e+00 : f32
      %146 = vector.broadcast %cst_60 : f32 to vector<32x16xf32>
      %147 = arith.subf %146, %136 : vector<32x16xf32>
      %148 = arith.mulf %147, %144 : vector<32x16xf32>
      %149 = arith.addf %145, %148 : vector<32x16xf32>
      %cst_61 = arith.constant 0.000000e+00 : f32
      %150 = vector.broadcast %cst_61 : f32 to vector<32x16xf32>
      %151 = arith.subf %150, %149 : vector<32x16xf32>
      %152 = vector.shape_cast %151 : vector<32x16xf32> to vector<1x32x16xf32>
      %cst_62 = arith.constant dense<0.000000e+00> : vector<1xf32>
      %153 = vector.multi_reduction <add>, %152, %cst_62 [1, 2] : vector<1x32x16xf32> to vector<1xf32>
      %154 = vector.shape_cast %153 : vector<1xf32> to vector<1x1x1xf32>
      %155 = vector.extract %154[0, 0, 0] : f32 from vector<1x1x1xf32>
      %c0_63 = arith.constant 0 : index
      %156 = memref.load %arg6[%c0_63] : memref<1xf32, #tpu.memory_space<smem>>
      %157 = arith.addf %156, %155 : f32
      %c0_64 = arith.constant 0 : index
      %158 = memref.load %arg6[%c0_64] : memref<1xf32, #tpu.memory_space<smem>>
      memref.store %157, %arg6[%c0_64] : memref<1xf32, #tpu.memory_space<smem>>
      %c0_i32_65 = arith.constant 0 : i32
      %159 = arith.cmpi eq, %arg1, %c0_i32_65 : i32
      %160 = arith.extui %159 : i1 to i32
      %c0_i32_66 = arith.constant 0 : i32
      %161 = arith.cmpi ne, %160, %c0_i32_66 : i32
      scf.if %161 {
        %cst_67 = arith.constant 9.765625E-4 : f32
        %162 = arith.mulf %cst_67, %157 : f32
        %c0_68 = arith.constant 0 : index
        %c0_69 = arith.constant 0 : index
        %163 = memref.load %arg4[%c0_68, %c0_69] : memref<1x1xf32, #tpu.memory_space<smem>>
        memref.store %162, %arg4[%c0_68, %c0_69] : memref<1x1xf32, #tpu.memory_space<smem>>
      } else {
      }
    } else {
    }
    return
  }
  func.func @transform_0(%arg0: i32, %arg1: i32) -> (i32, i32) {
    %c0_i32 = arith.constant 0 : i32
    %c0_i32_0 = arith.constant 0 : i32
    return %arg1, %c0_i32 : i32, i32
  }
  func.func @transform_1(%arg0: i32, %arg1: i32) -> (i32, i32) {
    %c0_i32 = arith.constant 0 : i32
    %c0_i32_0 = arith.constant 0 : i32
    return %arg1, %c0_i32 : i32, i32
  }
  func.func @transform_2(%arg0: i32, %arg1: i32) -> (i32, i32) {
    %c0_i32 = arith.constant 0 : i32
    %c0_i32_0 = arith.constant 0 : i32
    %c0_i32_1 = arith.constant 0 : i32
    return %c0_i32, %c0_i32_0 : i32, i32
  }
}

</mosaic_0001>

<llo_original>
// kernel: tpu_custom_call.1
$region0: #{tpu_custom_call.1}
  #allocation0 [shape = 'u32[]', space=smem, size = 0x4, offset = 0x4, fixed_abs, tag = 'smem constant byte address 0x4 - core index']
  #allocation1 [shape = 'u32[72,128]{1,0:T(1,128)}', space=vmem, size = 0x9000, scoped, tag = 'internal scratch']
  #allocation2 [shape = 'f32[4]{0:T(128)}', space=smem, size = 0x200, scoped, tag = 'scratch operand']
  #allocation3 [shape = 'f32[1]{0:T(128)}', space=smem, size = 0x200, scoped, tag = 'scratch operand']
  %s0 = inlined_call_operand.vmem [shape: f32[32,16], index: 0, kind: input, shape index: {}]
  %s1 = inlined_call_operand.vmem [shape: f32[32,16], index: 1, kind: input, shape index: {}]
  %s2 = inlined_call_operand.hbm [shape: f32[1,1], index: 2, kind: output, shape index: {}]
  %s3 = sld [smem:[#allocation0]]
  $region57: #{tpu_custom_call.1} parent=0
    _
  %s5 = ssub.s32 1, %s3
  %s6 = scalar_select 0, %s5, %s3
  $region1: #{tpu_custom_call.1} parent=0
    #allocation4 [shape = 'u8[512]{0}', space=smem, size = 0x200, scoped, tag = 'output window, operand 0, single buffered']
    #allocation5 [shape = 's32[2]{0}', space=sflag, size = 0x8, scoped, tag = 'scoped memory for tpu_custom_call.1']
    %7 = vsyncpa [#allocation5], 0
    loop: start=0, step=1, limit=4
    $region2: #{tpu_custom_call.1} parent=1 // loop_pre_header
      _
    $region3: #{tpu_custom_call.1} parent=1 // loop_header
      %s9 = sphi 0, %s13
      %p10 = scmp.ge.s32.totalorder %s9, 4
      %s16 = sphi 0, %s28
      %s17 = sphi 0, %s24
      %s18 = sphi 0, %s16
      %s19 = sphi 0, %s17
      %s20 = sphi 0, %s18
      %s21 = sphi 0, %s19
      %s31 = sphi 0, %s33
      %s34 = sphi 0, %s31
      %s35 = sphi 0, %s34
      %s51 = sphi 0, %s35
      %s57 = sphi 0, %s59
      %s60 = sphi 0, %s57
      %s61 = sphi 0, %s60
      %s77 = sphi 0, %s61
      %s81 = sphi 0, %s81
      %s83 = sphi 0, %s81
      %s84 = sphi 0, %s83
      %s98 = sphi 0, %s84
    $region4: #{tpu_custom_call.1} parent=1 // loop_header_branch
      %12 = sbr.rel (%p10) target = $region8
    $region5: #{tpu_custom_call.1} parent=1 // loop_body
      %s14 = ssub.s32 %s9, 1
      %s15 = ssub.s32 %s9, 2
      %s22 = sadd.s32 1, %s17
      %p23 = scmp.ge.s32.totalorder %s22, 1
      %s24 = scalar_select %p23, 0, %s22
      %s25 = sadd.s32 1, %s16
      %s26 = scalar_select %p23, %s25, %s16
      %p27 = scmp.ge.s32.totalorder %s26, 2
      %s28 = scalar_select %p27, 0, %s26
      %s29 = ssub.s32 %s17, %s24
      %p30 = scmp.eq.s32.totalorder %s29, 0
      %s32 = sadd.s32 %s31, 1
      %s33 = scalar_select %p30, %s31, %s32
      %p36 = pneg %p30
      %p37 = scmp.eq.s32.totalorder %s9, 1
      %p38 = por %p36, %p37
      %p39 = scmp.ne.s32.totalorder %s31, %s34
      %p40 = scmp.eq.s32.totalorder %s9, 0
      %p41 = por %p39, %p40
      %p42 = scmp.ne.s32.totalorder %s31, %s34
      %p43 = scmp.eq.s32.totalorder %s14, 1
      %p44 = por %p42, %p43
      %p45 = scmp.ne.s32.totalorder %s34, %s35
      %p46 = scmp.eq.s32.totalorder %s14, 0
      %p47 = por %p45, %p46
      %p48 = scmp.ne.s32.totalorder %s34, %s35
      %p49 = scmp.eq.s32.totalorder %s15, 1
      %p50 = por %p48, %p49
      %p52 = scmp.ne.s32.totalorder %s35, %s51
      %p53 = scmp.eq.s32.totalorder %s15, 0
      %p54 = por %p52, %p53
      %s55 = ssub.s32 %s17, %s24
      %p56 = scmp.eq.s32.totalorder %s55, 0
      %s58 = sadd.s32 %s57, 1
      %s59 = scalar_select %p56, %s57, %s58
      %p62 = pneg %p56
      %p63 = scmp.eq.s32.totalorder %s9, 1
      %p64 = por %p62, %p63
      %p65 = scmp.ne.s32.totalorder %s57, %s60
      %p66 = scmp.eq.s32.totalorder %s9, 0
      %p67 = por %p65, %p66
      %p68 = scmp.ne.s32.totalorder %s57, %s60
      %p69 = scmp.eq.s32.totalorder %s14, 1
      %p70 = por %p68, %p69
      %p71 = scmp.ne.s32.totalorder %s60, %s61
      %p72 = scmp.eq.s32.totalorder %s14, 0
      %p73 = por %p71, %p72
      %p74 = scmp.ne.s32.totalorder %s60, %s61
      %p75 = scmp.eq.s32.totalorder %s15, 1
      %p76 = por %p74, %p75
      %p78 = scmp.ne.s32.totalorder %s61, %s77
      %p79 = scmp.eq.s32.totalorder %s15, 0
      %p80 = por %p78, %p79
      %s82 = sadd.s32 %s81, 1
      %p85 = scmp.eq.s32.totalorder %s9, 1
      %p86 = scmp.ne.s32.totalorder %s81, %s83
      %p87 = scmp.eq.s32.totalorder %s9, 0
      %p88 = por %p86, %p87
      %p89 = scmp.ne.s32.totalorder %s81, %s83
      %p90 = scmp.eq.s32.totalorder %s14, 1
      %p91 = por %p89, %p90
      %p92 = scmp.ne.s32.totalorder %s83, %s84
      %p93 = scmp.eq.s32.totalorder %s14, 0
      %p94 = por %p92, %p93
      %p95 = scmp.ne.s32.totalorder %s83, %s84
      %p96 = scmp.eq.s32.totalorder %s15, 1
      %p97 = por %p95, %p96
      %p99 = scmp.ne.s32.totalorder %s84, %s98
      %p100 = scmp.eq.s32.totalorder %s15, 0
      %p101 = por %p99, %p100
      %p102 = scmp.le.s32.totalorder 1, %s9
      %p103 = scmp.lt.s32.totalorder %s9, 3
      %p104 = pnand %p102, %p103
      %p105 = pneg %p104
      // Predicated region
      $region9: #{tpu_custom_call.1} parent=5 // pred_check
        _
      $region10: #{tpu_custom_call.1} parent=5 // pred_check_branch
        %107 = sbr.rel (%p104) target = $region12
      $region11: #{tpu_custom_call.1} parent=5 // pred_region
        %s108 = ssub.s32 %s9, 1
        // Predicated region
        $region13: #{tpu_custom_call.1} parent=11 // pred_check
          %p109 = pneg %p47
        $region14: #{tpu_custom_call.1} parent=11 // pred_check_branch
          %111 = sbr.rel (%p109) target = $region16
        $region15: #{tpu_custom_call.1} parent=11 // pred_region
          %s112 = smul.u32 4, %s19
          %p113 = scmp.lt.s32.totalorder %s112, 3
          %s114 = scalar_select %p113, %s112, 3
          %s115 = smul.addr %s114, 8
          %s116 = scalar_lea.vmem %s0, %s115
          %s117 = smul.u32 4, %s19
        $region16: #{tpu_custom_call.1} parent=11 // pred_fallthru
          _
        // Predicated region
        $region17: #{tpu_custom_call.1} parent=11 // pred_check
          %p118 = pneg %p73
        $region18: #{tpu_custom_call.1} parent=11 // pred_check_branch
          %120 = sbr.rel (%p118) target = $region20
        $region19: #{tpu_custom_call.1} parent=11 // pred_region
          %s121 = smul.u32 4, %s19
          %p122 = scmp.lt.s32.totalorder %s121, 3
          %s123 = scalar_select %p122, %s121, 3
          %s124 = smul.addr %s123, 8
          %s125 = scalar_lea.vmem %s1, %s124
          %s126 = smul.u32 4, %s19
        $region20: #{tpu_custom_call.1} parent=11 // pred_fallthru
          _
      $region12: #{tpu_custom_call.1} parent=5 // pred_fallthru
        _
      %p127 = scmp.lt.s32.totalorder %s9, 2
      // Predicated region
      $region21: #{tpu_custom_call.1} parent=5 // pred_check
        %p128 = pneg %p127
      $region22: #{tpu_custom_call.1} parent=5 // pred_check_branch
        %130 = sbr.rel (%p128) target = $region24
      $region23: #{tpu_custom_call.1} parent=5 // pred_region
        _
      $region24: #{tpu_custom_call.1} parent=5 // pred_fallthru
        _
      %p131 = scmp.le.s32.totalorder 1, %s9
      %p132 = scmp.lt.s32.totalorder %s9, 3
      %p133 = pnand %p131, %p132
      %p134 = pneg %p133
      // Predicated region
      $region25: #{tpu_custom_call.1} parent=5 // pred_check
        _
      $region26: #{tpu_custom_call.1} parent=5 // pred_check_branch
        %136 = sbr.rel (%p133) target = $region28
      $region27: #{tpu_custom_call.1} parent=5 // pred_region
        %s137 = ssub.s32 %s9, 1
        %s138 = smul.u32 4, %s19
        %p139 = scmp.lt.s32.totalorder %s138, 3
        %s140 = scalar_select %p139, %s138, 3
        %s141 = smul.addr %s140, 8
        %s142 = scalar_lea.vmem %s0, %s141
        %p143 = pneg %p47
        %p144 = pneg %p44
        %s145 = smul.u32 4, %s19
        %p146 = scmp.lt.s32.totalorder %s145, 3
        %s147 = scalar_select %p146, %s145, 3
        %s148 = smul.addr %s147, 8
        %s149 = scalar_lea.vmem %s1, %s148
        %p150 = pneg %p73
        %p151 = pneg %p70
        %p152 = pneg %p94
        %p153 = pneg %p91
        %s154 = smul.u32 4, %s19
        %p155 = scmp.lt.s32.totalorder %s154, 3
        %s156 = scalar_select %p155, %s154, 3
        %s157 = smul.addr %s156, 8
        %s158 = scalar_lea.vmem %s0, %s157
        %s159 = smul.u32 4, %s19
        %s160 = smul.u32 4, %s19
        %p161 = scmp.lt.s32.totalorder %s160, 3
        %s162 = scalar_select %p161, %s160, 3
        %s163 = smul.addr %s162, 8
        %s164 = scalar_lea.vmem %s1, %s163
        %s165 = smul.u32 4, %s19
        %v166 = vld [vmem:[%s158] sm:$0xff]
        %v167 = vld [vmem:[%s158 + $0x8] sm:$0xff]
        %v168 = vld [vmem:[%s158 + $0x10] sm:$0xff]
        %v169 = vld [vmem:[%s158 + $0x18] sm:$0xff]
        %v170 = vld [vmem:[%s164] sm:$0xff]
        %v171 = vld [vmem:[%s164 + $0x8] sm:$0xff]
        %v172 = vld [vmem:[%s164 + $0x10] sm:$0xff]
        %v173 = vld [vmem:[%s164 + $0x18] sm:$0xff]
        %v174 = vlaneseq
        %v175 = vshrl.u32 %v174, 7
        %v176 = vadd.s32 %v175, 8
        %v177 = vadd.s32 %v175, 16
        %v178 = vadd.s32 %v175, 24
        %vm179 = vcmp.lt.s32.totalorder %v175, 0
        %v180 = vsub.s32 0, %v175
        %v181 = vsel %vm179, %v180, %v175
        %v182 = vshrl.u32 %v181, 4
        %v183 = vand.u32 %v181, 15
        %v184 = vsub.s32 0, %v183
        %v185 = vsel %vm179, %v184, %v183
        %vm186 = vcmp.lt.s32.totalorder %v176, 0
        %v187 = vsub.s32 0, %v176
        %v188 = vsel %vm186, %v187, %v176
        %v189 = vshrl.u32 %v188, 4
        %v190 = vand.u32 %v188, 15
        %v191 = vsub.s32 0, %v190
        %v192 = vsel %vm186, %v191, %v190
        %vm193 = vcmp.lt.s32.totalorder %v177, 0
        %v194 = vsub.s32 0, %v177
        %v195 = vsel %vm193, %v194, %v177
        %v196 = vshrl.u32 %v195, 4
        %v197 = vand.u32 %v195, 15
        %v198 = vsub.s32 0, %v197
        %v199 = vsel %vm193, %v198, %v197
        %vm200 = vcmp.lt.s32.totalorder %v178, 0
        %v201 = vsub.s32 0, %v178
        %v202 = vsel %vm200, %v201, %v178
        %v203 = vshrl.u32 %v202, 4
        %v204 = vand.u32 %v202, 15
        %v205 = vsub.s32 0, %v204
        %v206 = vsel %vm200, %v205, %v204
        %vm207 = vcmp.ne.s32.totalorder %v185, 0
        %vm208 = vcmp.ne.s32.totalorder %v192, 0
        %vm209 = vcmp.ne.s32.totalorder %v199, 0
        %vm210 = vcmp.ne.s32.totalorder %v206, 0
        %vm211 = vcmp.lt.s32.totalorder %v185, 0
        %vm212 = vcmp.lt.s32.totalorder %v192, 0
        %vm213 = vcmp.lt.s32.totalorder %v199, 0
        %vm214 = vcmp.lt.s32.totalorder %v206, 0
        %vm215 = vmand %vm211, %vm207
        %vm216 = vmand %vm212, %vm208
        %vm217 = vmand %vm213, %vm209
        %vm218 = vmand %vm214, %vm210
        %v219 = vadd.s32 %v185, 16
        %v220 = vadd.s32 %v192, 16
        %v221 = vadd.s32 %v199, 16
        %v222 = vadd.s32 %v206, 16
        %v223 = vsel %vm215, %v219, %v185
        %v224 = vsel %vm216, %v220, %v192
        %v225 = vsel %vm217, %v221, %v199
        %v226 = vsel %vm218, %v222, %v206
        %v227 = vlaneseq
        %v228 = vand.u32 %v227, 127
        %vm229 = vcmp.eq.s32.totalorder %v223, 0
        %vm230 = vcmp.eq.s32.totalorder %v224, 0
        %vm231 = vcmp.eq.s32.totalorder %v225, 0
        %vm232 = vcmp.eq.s32.totalorder %v226, 0
        %vm233 = vcmp.eq.s32.totalorder %v223, 15
        %vm234 = vcmp.eq.s32.totalorder %v224, 15
        %vm235 = vcmp.eq.s32.totalorder %v225, 15
        %vm236 = vcmp.eq.s32.totalorder %v226, 15
        %vm237 = vcmp.eq.s32.totalorder %v228, 0
        %vm238 = vcmp.eq.s32.totalorder %v228, 15
        %v239 = vrot.slane %v166, 7
        %v240 = vrot.slane %v167, 7
        %v241 = vrot.slane %v168, 7
        %v242 = vrot.slane %v169, 7
        %vm243 = vcmp.lt.s32.totalorder %v175, 1
        %v244 = vsel %vm243, %v241, %v242
        %v245 = vsel %vm243, %v240, %v241
        %v246 = vsel %vm243, %v239, %v240
        %v247 = vsel %vm243, %v242, %v239
        %v248 = vsel %vm229, 0.0, %v247
        %v249 = vsel %vm230, 0.0, %v246
        %v250 = vsel %vm231, 0.0, %v245
        %v251 = vsel %vm232, 0.0, %v244
        %v252 = vmul.f32 %v166, 2.0
        %v253 = vmul.f32 %v167, 2.0
        %v254 = vmul.f32 %v168, 2.0
        %v255 = vmul.f32 %v169, 2.0
        %v256 = vadd.f32 %v248, %v252
        %v257 = vadd.f32 %v249, %v253
        %v258 = vadd.f32 %v250, %v254
        %v259 = vadd.f32 %v251, %v255
        %v260 = vrot.slane %v166, 1
        %v261 = vrot.slane %v167, 1
        %v262 = vrot.slane %v168, 1
        %v263 = vrot.slane %v169, 1
        %vm264 = vcmp.lt.s32.totalorder %v175, 7
        %v265 = vsel %vm264, %v262, %v263
        %v266 = vsel %vm264, %v261, %v262
        %v267 = vsel %vm264, %v260, %v261
        %v268 = vsel %vm264, %v263, %v260
        %v269 = vsel %vm233, 0.0, %v267
        %v270 = vsel %vm234, 0.0, %v266
        %v271 = vsel %vm235, 0.0, %v265
        %v272 = vsel %vm236, 0.0, %v268
        %v273 = vadd.f32 %v256, %v269
        %v274 = vadd.f32 %v257, %v270
        %v275 = vadd.f32 %v258, %v271
        %v276 = vadd.f32 %v259, %v272
        %vm277 = vcmask 1047680
        %278 = vrot.lane.b32.xlu0 %v166, 16
        %v279 = vpop.permute.xlu0 %278
        %v280 = vsel %vm277, %v279, %v166
        %281 = vrot.lane.b32.xlu0 %v167, 16
        %v282 = vpop.permute.xlu0 %281
        %v283 = vsel %vm277, %v282, %v167
        %284 = vrot.lane.b32.xlu0 %v168, 16
        %v285 = vpop.permute.xlu0 %284
        %v286 = vsel %vm277, %v285, %v168
        %287 = vrot.lane.b32.xlu0 %v169, 16
        %v288 = vpop.permute.xlu0 %287
        %v289 = vsel %vm277, %v288, %v169
        %290 = vrot.lane.b32.xlu0 %v280, 16
        %v291 = vpop.permute.xlu0 %290
        %292 = vrot.lane.b32.xlu0 %v283, 16
        %v293 = vpop.permute.xlu0 %292
        %294 = vrot.lane.b32.xlu0 %v286, 16
        %v295 = vpop.permute.xlu0 %294
        %296 = vrot.lane.b32.xlu0 %v289, 16
        %v297 = vpop.permute.xlu0 %296
        %v298 = vsel %vm277, %v291, %v166
        %v299 = vsel %vm277, %v293, %v167
        %v300 = vsel %vm277, %v295, %v168
        %v301 = vsel %vm277, %v297, %v169
        %306 = vrot.lane.b32.xlu0 %v298, 113
        %v307 = vpop.permute.xlu0 %306
        %308 = vrot.lane.b32.xlu0 %v299, 113
        %v309 = vpop.permute.xlu0 %308
        %310 = vrot.lane.b32.xlu0 %v300, 113
        %v311 = vpop.permute.xlu0 %310
        %312 = vrot.lane.b32.xlu0 %v301, 113
        %v313 = vpop.permute.xlu0 %312
        %v318 = vsel %vm237, 0.0, %v307
        %v319 = vsel %vm237, 0.0, %v309
        %v320 = vsel %vm237, 0.0, %v311
        %v321 = vsel %vm237, 0.0, %v313
        %v322 = vadd.f32 %v318, %v252
        %v323 = vadd.f32 %v319, %v253
        %v324 = vadd.f32 %v320, %v254
        %v325 = vadd.f32 %v321, %v255
        %326 = vrot.lane.b32.xlu0 %v298, 127
        %v327 = vpop.permute.xlu0 %326
        %328 = vrot.lane.b32.xlu0 %v299, 127
        %v329 = vpop.permute.xlu0 %328
        %330 = vrot.lane.b32.xlu0 %v300, 127
        %v331 = vpop.permute.xlu0 %330
        %332 = vrot.lane.b32.xlu0 %v301, 127
        %v333 = vpop.permute.xlu0 %332
        %v338 = vsel %vm238, 0.0, %v327
        %v339 = vsel %vm238, 0.0, %v329
        %v340 = vsel %vm238, 0.0, %v331
        %v341 = vsel %vm238, 0.0, %v333
        %v342 = vadd.f32 %v322, %v338
        %v343 = vadd.f32 %v323, %v339
        %v344 = vadd.f32 %v324, %v340
        %v345 = vadd.f32 %v325, %v341
        %346 = vrot.lane.b32.xlu0 %v273, 16
        %v347 = vpop.permute.xlu0 %346
        %v348 = vsel %vm277, %v347, %v273
        %349 = vrot.lane.b32.xlu0 %v274, 16
        %v350 = vpop.permute.xlu0 %349
        %v351 = vsel %vm277, %v350, %v274
        %352 = vrot.lane.b32.xlu0 %v275, 16
        %v353 = vpop.permute.xlu0 %352
        %v354 = vsel %vm277, %v353, %v275
        %355 = vrot.lane.b32.xlu0 %v276, 16
        %v356 = vpop.permute.xlu0 %355
        %v357 = vsel %vm277, %v356, %v276
        %358 = vrot.lane.b32.xlu0 %v348, 16
        %v359 = vpop.permute.xlu0 %358
        %360 = vrot.lane.b32.xlu0 %v351, 16
        %v361 = vpop.permute.xlu0 %360
        %362 = vrot.lane.b32.xlu0 %v354, 16
        %v363 = vpop.permute.xlu0 %362
        %364 = vrot.lane.b32.xlu0 %v357, 16
        %v365 = vpop.permute.xlu0 %364
        %v366 = vsel %vm277, %v359, %v273
        %v367 = vsel %vm277, %v361, %v274
        %v368 = vsel %vm277, %v363, %v275
        %v369 = vsel %vm277, %v365, %v276
        %374 = vrot.lane.b32.xlu0 %v366, 127
        %v375 = vpop.permute.xlu0 %374
        %376 = vrot.lane.b32.xlu0 %v367, 127
        %v377 = vpop.permute.xlu0 %376
        %378 = vrot.lane.b32.xlu0 %v368, 127
        %v379 = vpop.permute.xlu0 %378
        %380 = vrot.lane.b32.xlu0 %v369, 127
        %v381 = vpop.permute.xlu0 %380
        %v386 = vsel %vm238, 0.0, %v375
        %v387 = vsel %vm238, 0.0, %v377
        %v388 = vsel %vm238, 0.0, %v379
        %v389 = vsel %vm238, 0.0, %v381
        %390 = vrot.lane.b32.xlu0 %v366, 113
        %v391 = vpop.permute.xlu0 %390
        %392 = vrot.lane.b32.xlu0 %v367, 113
        %v393 = vpop.permute.xlu0 %392
        %394 = vrot.lane.b32.xlu0 %v368, 113
        %v395 = vpop.permute.xlu0 %394
        %396 = vrot.lane.b32.xlu0 %v369, 113
        %v397 = vpop.permute.xlu0 %396
        %v402 = vsel %vm237, 0.0, %v391
        %v403 = vsel %vm237, 0.0, %v393
        %v404 = vsel %vm237, 0.0, %v395
        %v405 = vsel %vm237, 0.0, %v397
        %v406 = vsub.f32 %v386, %v402
        %v407 = vsub.f32 %v387, %v403
        %v408 = vsub.f32 %v388, %v404
        %v409 = vsub.f32 %v389, %v405
        %v410 = vrot.slane %v342, 1
        %v411 = vrot.slane %v343, 1
        %v412 = vrot.slane %v344, 1
        %v413 = vrot.slane %v345, 1
        %v414 = vsel %vm264, %v412, %v413
        %v415 = vsel %vm264, %v411, %v412
        %v416 = vsel %vm264, %v410, %v411
        %v417 = vsel %vm264, %v413, %v410
        %v418 = vsel %vm233, 0.0, %v416
        %v419 = vsel %vm234, 0.0, %v415
        %v420 = vsel %vm235, 0.0, %v414
        %v421 = vsel %vm236, 0.0, %v417
        %v422 = vrot.slane %v342, 7
        %v423 = vrot.slane %v343, 7
        %v424 = vrot.slane %v344, 7
        %v425 = vrot.slane %v345, 7
        %v426 = vsel %vm243, %v424, %v425
        %v427 = vsel %vm243, %v423, %v424
        %v428 = vsel %vm243, %v422, %v423
        %v429 = vsel %vm243, %v425, %v422
        %v430 = vsel %vm229, 0.0, %v429
        %v431 = vsel %vm230, 0.0, %v428
        %v432 = vsel %vm231, 0.0, %v427
        %v433 = vsel %vm232, 0.0, %v426
        %v434 = vsub.f32 %v418, %v430
        %v435 = vsub.f32 %v419, %v431
        %v436 = vsub.f32 %v420, %v432
        %v437 = vsub.f32 %v421, %v433
        %v438 = vmul.f32 %v406, %v406
        %v439 = vmul.f32 %v407, %v407
        %v440 = vmul.f32 %v408, %v408
        %v441 = vmul.f32 %v409, %v409
        %v442 = vmul.f32 %v434, %v434
        %v443 = vmul.f32 %v435, %v435
        %v444 = vmul.f32 %v436, %v436
        %v445 = vmul.f32 %v437, %v437
        %v446 = vadd.f32 %v438, %v442
        %v447 = vadd.f32 %v439, %v443
        %v448 = vadd.f32 %v440, %v444
        %v449 = vadd.f32 %v441, %v445
        %v450 = vadd.f32 %v446, 1e-06
        %v451 = vadd.f32 %v447, 1e-06
        %v452 = vadd.f32 %v448, 1e-06
        %v453 = vadd.f32 %v449, 1e-06
        %v454 = vrsqrt.pop %v450
        %v455 = vmul.f32 %v454, %v450
        %v456 = vmul.f32 %v455, %v454
        %v457 = vmul.f32 0.5, %v456
        %v458 = vsub.f32 1.5, %v457
        %v459 = vmul.f32 %v454, %v458
        %v460 = vmul.f32 %v450, %v459
        %vm461 = vcmp.eq.f32.partialorder %v450, inf
        %v462 = vsel %vm461, %v450, %v460
        %vm463 = vcmp.eq.f32.partialorder %v450, 0.0
        %v464 = vand.u32 %v450, 2147483648
        %v465 = vsel %vm463, %v464, %v462
        %v466 = vrsqrt.pop %v451
        %v467 = vmul.f32 %v466, %v451
        %v468 = vmul.f32 %v467, %v466
        %v469 = vmul.f32 0.5, %v468
        %v470 = vsub.f32 1.5, %v469
        %v471 = vmul.f32 %v466, %v470
        %v472 = vmul.f32 %v451, %v471
        %vm473 = vcmp.eq.f32.partialorder %v451, inf
        %v474 = vsel %vm473, %v451, %v472
        %vm475 = vcmp.eq.f32.partialorder %v451, 0.0
        %v476 = vand.u32 %v451, 2147483648
        %v477 = vsel %vm475, %v476, %v474
        %v478 = vrsqrt.pop %v452
        %v479 = vmul.f32 %v478, %v452
        %v480 = vmul.f32 %v479, %v478
        %v481 = vmul.f32 0.5, %v480
        %v482 = vsub.f32 1.5, %v481
        %v483 = vmul.f32 %v478, %v482
        %v484 = vmul.f32 %v452, %v483
        %vm485 = vcmp.eq.f32.partialorder %v452, inf
        %v486 = vsel %vm485, %v452, %v484
        %vm487 = vcmp.eq.f32.partialorder %v452, 0.0
        %v488 = vand.u32 %v452, 2147483648
        %v489 = vsel %vm487, %v488, %v486
        %v490 = vrsqrt.pop %v453
        %v491 = vmul.f32 %v490, %v453
        %v492 = vmul.f32 %v491, %v490
        %v493 = vmul.f32 0.5, %v492
        %v494 = vsub.f32 1.5, %v493
        %v495 = vmul.f32 %v490, %v494
        %v496 = vmul.f32 %v453, %v495
        %vm497 = vcmp.eq.f32.partialorder %v453, inf
        %v498 = vsel %vm497, %v453, %v496
        %vm499 = vcmp.eq.f32.partialorder %v453, 0.0
        %v500 = vand.u32 %v453, 2147483648
        %v501 = vsel %vm499, %v500, %v498
        %v502 = vrot.slane %v170, 7
        %v503 = vrot.slane %v171, 7
        %v504 = vrot.slane %v172, 7
        %v505 = vrot.slane %v173, 7
        %v506 = vsel %vm243, %v504, %v505
        %v507 = vsel %vm243, %v503, %v504
        %v508 = vsel %vm243, %v502, %v503
        %v509 = vsel %vm243, %v505, %v502
        %v510 = vsel %vm229, 0.0, %v509
        %v511 = vsel %vm230, 0.0, %v508
        %v512 = vsel %vm231, 0.0, %v507
        %v513 = vsel %vm232, 0.0, %v506
        %v514 = vmul.f32 %v170, 2.0
        %v515 = vmul.f32 %v171, 2.0
        %v516 = vmul.f32 %v172, 2.0
        %v517 = vmul.f32 %v173, 2.0
        %v518 = vadd.f32 %v510, %v514
        %v519 = vadd.f32 %v511, %v515
        %v520 = vadd.f32 %v512, %v516
        %v521 = vadd.f32 %v513, %v517
        %v522 = vrot.slane %v170, 1
        %v523 = vrot.slane %v171, 1
        %v524 = vrot.slane %v172, 1
        %v525 = vrot.slane %v173, 1
        %v526 = vsel %vm264, %v524, %v525
        %v527 = vsel %vm264, %v523, %v524
        %v528 = vsel %vm264, %v522, %v523
        %v529 = vsel %vm264, %v525, %v522
        %v530 = vsel %vm233, 0.0, %v528
        %v531 = vsel %vm234, 0.0, %v527
        %v532 = vsel %vm235, 0.0, %v526
        %v533 = vsel %vm236, 0.0, %v529
        %v534 = vadd.f32 %v518, %v530
        %v535 = vadd.f32 %v519, %v531
        %v536 = vadd.f32 %v520, %v532
        %v537 = vadd.f32 %v521, %v533
        %538 = vrot.lane.b32.xlu0 %v170, 16
        %v539 = vpop.permute.xlu0 %538
        %v540 = vsel %vm277, %v539, %v170
        %541 = vrot.lane.b32.xlu0 %v171, 16
        %v542 = vpop.permute.xlu0 %541
        %v543 = vsel %vm277, %v542, %v171
        %544 = vrot.lane.b32.xlu0 %v172, 16
        %v545 = vpop.permute.xlu0 %544
        %v546 = vsel %vm277, %v545, %v172
        %547 = vrot.lane.b32.xlu0 %v173, 16
        %v548 = vpop.permute.xlu0 %547
        %v549 = vsel %vm277, %v548, %v173
        %550 = vrot.lane.b32.xlu0 %v540, 16
        %v551 = vpop.permute.xlu0 %550
        %552 = vrot.lane.b32.xlu0 %v543, 16
        %v553 = vpop.permute.xlu0 %552
        %554 = vrot.lane.b32.xlu0 %v546, 16
        %v555 = vpop.permute.xlu0 %554
        %556 = vrot.lane.b32.xlu0 %v549, 16
        %v557 = vpop.permute.xlu0 %556
        %v558 = vsel %vm277, %v551, %v170
        %v559 = vsel %vm277, %v553, %v171
        %v560 = vsel %vm277, %v555, %v172
        %v561 = vsel %vm277, %v557, %v173
        %566 = vrot.lane.b32.xlu0 %v558, 113
        %v567 = vpop.permute.xlu0 %566
        %568 = vrot.lane.b32.xlu0 %v559, 113
        %v569 = vpop.permute.xlu0 %568
        %570 = vrot.lane.b32.xlu0 %v560, 113
        %v571 = vpop.permute.xlu0 %570
        %572 = vrot.lane.b32.xlu0 %v561, 113
        %v573 = vpop.permute.xlu0 %572
        %v578 = vsel %vm237, 0.0, %v567
        %v579 = vsel %vm237, 0.0, %v569
        %v580 = vsel %vm237, 0.0, %v571
        %v581 = vsel %vm237, 0.0, %v573
        %v582 = vadd.f32 %v578, %v514
        %v583 = vadd.f32 %v579, %v515
        %v584 = vadd.f32 %v580, %v516
        %v585 = vadd.f32 %v581, %v517
        %586 = vrot.lane.b32.xlu0 %v558, 127
        %v587 = vpop.permute.xlu0 %586
        %588 = vrot.lane.b32.xlu0 %v559, 127
        %v589 = vpop.permute.xlu0 %588
        %590 = vrot.lane.b32.xlu0 %v560, 127
        %v591 = vpop.permute.xlu0 %590
        %592 = vrot.lane.b32.xlu0 %v561, 127
        %v593 = vpop.permute.xlu0 %592
        %v598 = vsel %vm238, 0.0, %v587
        %v599 = vsel %vm238, 0.0, %v589
        %v600 = vsel %vm238, 0.0, %v591
        %v601 = vsel %vm238, 0.0, %v593
        %v602 = vadd.f32 %v582, %v598
        %v603 = vadd.f32 %v583, %v599
        %v604 = vadd.f32 %v584, %v600
        %v605 = vadd.f32 %v585, %v601
        %606 = vrot.lane.b32.xlu0 %v534, 16
        %v607 = vpop.permute.xlu0 %606
        %v608 = vsel %vm277, %v607, %v534
        %609 = vrot.lane.b32.xlu0 %v535, 16
        %v610 = vpop.permute.xlu0 %609
        %v611 = vsel %vm277, %v610, %v535
        %612 = vrot.lane.b32.xlu0 %v536, 16
        %v613 = vpop.permute.xlu0 %612
        %v614 = vsel %vm277, %v613, %v536
        %615 = vrot.lane.b32.xlu0 %v537, 16
        %v616 = vpop.permute.xlu0 %615
        %v617 = vsel %vm277, %v616, %v537
        %618 = vrot.lane.b32.xlu0 %v608, 16
        %v619 = vpop.permute.xlu0 %618
        %620 = vrot.lane.b32.xlu0 %v611, 16
        %v621 = vpop.permute.xlu0 %620
        %622 = vrot.lane.b32.xlu0 %v614, 16
        %v623 = vpop.permute.xlu0 %622
        %624 = vrot.lane.b32.xlu0 %v617, 16
        %v625 = vpop.permute.xlu0 %624
        %v626 = vsel %vm277, %v619, %v534
        %v627 = vsel %vm277, %v621, %v535
        %v628 = vsel %vm277, %v623, %v536
        %v629 = vsel %vm277, %v625, %v537
        %634 = vrot.lane.b32.xlu0 %v626, 127
        %v635 = vpop.permute.xlu0 %634
        %636 = vrot.lane.b32.xlu0 %v627, 127
        %v637 = vpop.permute.xlu0 %636
        %638 = vrot.lane.b32.xlu0 %v628, 127
        %v639 = vpop.permute.xlu0 %638
        %640 = vrot.lane.b32.xlu0 %v629, 127
        %v641 = vpop.permute.xlu0 %640
        %v646 = vsel %vm238, 0.0, %v635
        %v647 = vsel %vm238, 0.0, %v637
        %v648 = vsel %vm238, 0.0, %v639
        %v649 = vsel %vm238, 0.0, %v641
        %650 = vrot.lane.b32.xlu0 %v626, 113
        %v651 = vpop.permute.xlu0 %650
        %652 = vrot.lane.b32.xlu0 %v627, 113
        %v653 = vpop.permute.xlu0 %652
        %654 = vrot.lane.b32.xlu0 %v628, 113
        %v655 = vpop.permute.xlu0 %654
        %656 = vrot.lane.b32.xlu0 %v629, 113
        %v657 = vpop.permute.xlu0 %656
        %v662 = vsel %vm237, 0.0, %v651
        %v663 = vsel %vm237, 0.0, %v653
        %v664 = vsel %vm237, 0.0, %v655
        %v665 = vsel %vm237, 0.0, %v657
        %v666 = vsub.f32 %v646, %v662
        %v667 = vsub.f32 %v647, %v663
        %v668 = vsub.f32 %v648, %v664
        %v669 = vsub.f32 %v649, %v665
        %v670 = vrot.slane %v602, 1
        %v671 = vrot.slane %v603, 1
        %v672 = vrot.slane %v604, 1
        %v673 = vrot.slane %v605, 1
        %v674 = vsel %vm264, %v672, %v673
        %v675 = vsel %vm264, %v671, %v672
        %v676 = vsel %vm264, %v670, %v671
        %v677 = vsel %vm264, %v673, %v670
        %v678 = vsel %vm233, 0.0, %v676
        %v679 = vsel %vm234, 0.0, %v675
        %v680 = vsel %vm235, 0.0, %v674
        %v681 = vsel %vm236, 0.0, %v677
        %v682 = vrot.slane %v602, 7
        %v683 = vrot.slane %v603, 7
        %v684 = vrot.slane %v604, 7
        %v685 = vrot.slane %v605, 7
        %v686 = vsel %vm243, %v684, %v685
        %v687 = vsel %vm243, %v683, %v684
        %v688 = vsel %vm243, %v682, %v683
        %v689 = vsel %vm243, %v685, %v682
        %v690 = vsel %vm229, 0.0, %v689
        %v691 = vsel %vm230, 0.0, %v688
        %v692 = vsel %vm231, 0.0, %v687
        %v693 = vsel %vm232, 0.0, %v686
        %v694 = vsub.f32 %v678, %v690
        %v695 = vsub.f32 %v679, %v691
        %v696 = vsub.f32 %v680, %v692
        %v697 = vsub.f32 %v681, %v693
        %v698 = vmul.f32 %v666, %v666
        %v699 = vmul.f32 %v667, %v667
        %v700 = vmul.f32 %v668, %v668
        %v701 = vmul.f32 %v669, %v669
        %v702 = vmul.f32 %v694, %v694
        %v703 = vmul.f32 %v695, %v695
        %v704 = vmul.f32 %v696, %v696
        %v705 = vmul.f32 %v697, %v697
        %v706 = vadd.f32 %v698, %v702
        %v707 = vadd.f32 %v699, %v703
        %v708 = vadd.f32 %v700, %v704
        %v709 = vadd.f32 %v701, %v705
        %v710 = vadd.f32 %v706, 1e-06
        %v711 = vadd.f32 %v707, 1e-06
        %v712 = vadd.f32 %v708, 1e-06
        %v713 = vadd.f32 %v709, 1e-06
        %v714 = vrsqrt.pop %v710
        %v715 = vmul.f32 %v714, %v710
        %v716 = vmul.f32 %v715, %v714
        %v717 = vmul.f32 0.5, %v716
        %v718 = vsub.f32 1.5, %v717
        %v719 = vmul.f32 %v714, %v718
        %v720 = vmul.f32 %v710, %v719
        %vm721 = vcmp.eq.f32.partialorder %v710, inf
        %v722 = vsel %vm721, %v710, %v720
        %vm723 = vcmp.eq.f32.partialorder %v710, 0.0
        %v724 = vand.u32 %v710, 2147483648
        %v725 = vsel %vm723, %v724, %v722
        %v726 = vrsqrt.pop %v711
        %v727 = vmul.f32 %v726, %v711
        %v728 = vmul.f32 %v727, %v726
        %v729 = vmul.f32 0.5, %v728
        %v730 = vsub.f32 1.5, %v729
        %v731 = vmul.f32 %v726, %v730
        %v732 = vmul.f32 %v711, %v731
        %vm733 = vcmp.eq.f32.partialorder %v711, inf
        %v734 = vsel %vm733, %v711, %v732
        %vm735 = vcmp.eq.f32.partialorder %v711, 0.0
        %v736 = vand.u32 %v711, 2147483648
        %v737 = vsel %vm735, %v736, %v734
        %v738 = vrsqrt.pop %v712
        %v739 = vmul.f32 %v738, %v712
        %v740 = vmul.f32 %v739, %v738
        %v741 = vmul.f32 0.5, %v740
        %v742 = vsub.f32 1.5, %v741
        %v743 = vmul.f32 %v738, %v742
        %v744 = vmul.f32 %v712, %v743
        %vm745 = vcmp.eq.f32.partialorder %v712, inf
        %v746 = vsel %vm745, %v712, %v744
        %vm747 = vcmp.eq.f32.partialorder %v712, 0.0
        %v748 = vand.u32 %v712, 2147483648
        %v749 = vsel %vm747, %v748, %v746
        %v750 = vrsqrt.pop %v713
        %v751 = vmul.f32 %v750, %v713
        %v752 = vmul.f32 %v751, %v750
        %v753 = vmul.f32 0.5, %v752
        %v754 = vsub.f32 1.5, %v753
        %v755 = vmul.f32 %v750, %v754
        %v756 = vmul.f32 %v713, %v755
        %vm757 = vcmp.eq.f32.partialorder %v713, inf
        %v758 = vsel %vm757, %v713, %v756
        %vm759 = vcmp.eq.f32.partialorder %v713, 0.0
        %v760 = vand.u32 %v713, 2147483648
        %v761 = vsel %vm759, %v760, %v758
        %p762 = scmp.eq.s32.totalorder %s18, 0
        %p763 = scmp.eq.s32.totalorder %s19, 0
        %p764 = pnand %p762, %p763
        %p765 = pneg %p764
        // Predicated region
        $region29: #{tpu_custom_call.1} parent=27 // pred_check
          _
        $region30: #{tpu_custom_call.1} parent=27 // pred_check_branch
          %767 = sbr.rel (%p764) target = $region32
        $region31: #{tpu_custom_call.1} parent=27 // pred_region
          %s768 = scalar_lea.smem [#allocation2], 0
          %769 = sst [smem:[%s768]] 3.4028235e+38
          %s770 = scalar_lea.smem [#allocation2], 1
          %771 = sst [smem:[%s770]] -3.4028235e+38
          %s772 = scalar_lea.smem [#allocation2], 2
          %773 = sst [smem:[%s772]] 3.4028235e+38
          %s774 = scalar_lea.smem [#allocation2], 3
          %775 = sst [smem:[%s774]] -3.4028235e+38
          %s776 = scalar_lea.smem [#allocation3], 0
          %777 = sst [smem:[%s776]] 0.0
        $region32: #{tpu_custom_call.1} parent=27 // pred_fallthru
          _
        // Predicated region
        $region33: #{tpu_custom_call.1} parent=27 // pred_check
          %p778 = pneg %p762
        $region34: #{tpu_custom_call.1} parent=27 // pred_check_branch
          %780 = sbr.rel (%p778) target = $region36
        $region35: #{tpu_custom_call.1} parent=27 // pred_region
          %s781 = sld [smem:[#allocation2]]
          %vm782 = vcmask 130048
          %v783 = vsel %vm782, %v465, inf
          %v784 = vsel %vm782, %v477, inf
          %v785 = vsel %vm782, %v489, inf
          %v786 = vsel %vm782, %v501, inf
          %v787 = vmin.f32 %v783, %v784
          %v788 = vmin.f32 %v785, %v786
          %v789 = vmin.f32 %v787, %v788
          %790 = vmin.xlane.f32.xlu0 %v789
          %v791 = vpop.xlane.xlu0 %790
          %v792 = vrot.slane %v791, 4
          %v793 = vmin.f32 %v791, %v792
          %v794 = vrot.slane %v793, 2
          %v795 = vmin.f32 %v793, %v794
          %v796 = vrot.slane %v795, 1
          %v797 = vmin.f32 %v795, %v796
          %s798 = vtos %v797
          %s799 = smin.f32 %s781, %s798
          %s800 = scalar_lea.smem [#allocation2], 0
          %801 = sst [smem:[%s800]] %s799
          %s802 = sld [smem:[#allocation2 + $0x1]]
          %v803 = vsel %vm782, %v465, -inf
          %v804 = vsel %vm782, %v477, -inf
          %v805 = vsel %vm782, %v489, -inf
          %v806 = vsel %vm782, %v501, -inf
          %v807 = vmax.f32 %v803, %v804
          %v808 = vmax.f32 %v805, %v806
          %v809 = vmax.f32 %v807, %v808
          %810 = vmax.xlane.f32.xlu0 %v809
          %v811 = vpop.xlane.xlu0 %810
          %v812 = vrot.slane %v811, 4
          %v813 = vmax.f32 %v811, %v812
          %v814 = vrot.slane %v813, 2
          %v815 = vmax.f32 %v813, %v814
          %v816 = vrot.slane %v815, 1
          %v817 = vmax.f32 %v815, %v816
          %s818 = vtos %v817
          %s819 = smax.f32 %s802, %s818
          %s820 = scalar_lea.smem [#allocation2], 1
          %821 = sst [smem:[%s820]] %s819
          %s822 = sld [smem:[#allocation2 + $0x2]]
          %v823 = vsel %vm782, %v725, inf
          %v824 = vsel %vm782, %v737, inf
          %v825 = vsel %vm782, %v749, inf
          %v826 = vsel %vm782, %v761, inf
          %v827 = vmin.f32 %v823, %v824
          %v828 = vmin.f32 %v825, %v826
          %v829 = vmin.f32 %v827, %v828
          %830 = vmin.xlane.f32.xlu0 %v829
          %v831 = vpop.xlane.xlu0 %830
          %v832 = vrot.slane %v831, 4
          %v833 = vmin.f32 %v831, %v832
          %v834 = vrot.slane %v833, 2
          %v835 = vmin.f32 %v833, %v834
          %v836 = vrot.slane %v835, 1
          %v837 = vmin.f32 %v835, %v836
          %s838 = vtos %v837
          %s839 = smin.f32 %s822, %s838
          %s840 = scalar_lea.smem [#allocation2], 2
          %841 = sst [smem:[%s840]] %s839
          %s842 = sld [smem:[#allocation2 + $0x3]]
          %v843 = vsel %vm782, %v725, -inf
          %v844 = vsel %vm782, %v737, -inf
          %v845 = vsel %vm782, %v749, -inf
          %v846 = vsel %vm782, %v761, -inf
          %v847 = vmax.f32 %v843, %v844
          %v848 = vmax.f32 %v845, %v846
          %v849 = vmax.f32 %v847, %v848
          %850 = vmax.xlane.f32.xlu0 %v849
          %v851 = vpop.xlane.xlu0 %850
          %v852 = vrot.slane %v851, 4
          %v853 = vmax.f32 %v851, %v852
          %v854 = vrot.slane %v853, 2
          %v855 = vmax.f32 %v853, %v854
          %v856 = vrot.slane %v855, 1
          %v857 = vmax.f32 %v855, %v856
          %s858 = vtos %v857
          %s859 = smax.f32 %s842, %s858
          %s860 = scalar_lea.smem [#allocation2], 3
          %861 = sst [smem:[%s860]] %s859
        $region36: #{tpu_custom_call.1} parent=27 // pred_fallthru
          _
        %p862 = scmp.eq.s32.totalorder %s18, 1
        // Predicated region
        $region37: #{tpu_custom_call.1} parent=27 // pred_check
          %p863 = pneg %p862
        $region38: #{tpu_custom_call.1} parent=27 // pred_check_branch
          %865 = sbr.rel (%p863) target = $region40
        $region39: #{tpu_custom_call.1} parent=27 // pred_region
          %s866 = sld [smem:[#allocation2]]
          %s867 = sld [smem:[#allocation2 + $0x1]]
          %s868 = ssub.f32 %s867, %s866
          %s869 = sadd.f32 %s868, 1e-06
          %v870 = vstv %s869
          %v871 = vrcp.pop %v870
          %v872 = vmul.f32 %v870, %v871
          %v873 = vsub.f32 1.0, %v872
          %v874 = vmul.f32 %v871, %v873
          %v875 = vadd.f32 %v871, %v874
          %vm876 = vweird.f32 %v870
          %vm877 = vweird.f32 %v871
          %vm878 = vmor %vm876, %vm877
          %v879 = vsel %vm878, %v871, %v875
          %v880 = vand.u32 2147483647, %v870
          %vm881 = vcmp.eq.f32.partialorder %v880, 8.507059e+37
          %v882 = vand.u32 %v870, 2147483648
          %v883 = vor.u32 1.1754944e-38, %v882
          %v884 = vsel %vm881, %v883, %v879
          %s885 = vtos %v884
          %s886 = sld [smem:[#allocation2 + $0x2]]
          %s887 = sld [smem:[#allocation2 + $0x3]]
          %s888 = ssub.f32 %s887, %s886
          %s889 = sadd.f32 %s888, 1e-06
          %v890 = vstv %s889
          %v891 = vrcp.pop %v890
          %v892 = vmul.f32 %v890, %v891
          %v893 = vsub.f32 1.0, %v892
          %v894 = vmul.f32 %v891, %v893
          %v895 = vadd.f32 %v891, %v894
          %vm896 = vweird.f32 %v890
          %vm897 = vweird.f32 %v891
          %vm898 = vmor %vm896, %vm897
          %v899 = vsel %vm898, %v891, %v895
          %v900 = vand.u32 2147483647, %v890
          %vm901 = vcmp.eq.f32.partialorder %v900, 8.507059e+37
          %v902 = vand.u32 %v890, 2147483648
          %v903 = vor.u32 1.1754944e-38, %v902
          %v904 = vsel %vm901, %v903, %v899
          %s905 = vtos %v904
          %v906 = vstv %s866
          %v907 = vsub.f32 %v465, %v906
          %v908 = vsub.f32 %v477, %v906
          %v909 = vsub.f32 %v489, %v906
          %v910 = vsub.f32 %v501, %v906
          %v911 = vstv %s885
          %v912 = vmul.f32 %v907, %v911
          %v913 = vmul.f32 %v908, %v911
          %v914 = vmul.f32 %v909, %v911
          %v915 = vmul.f32 %v910, %v911
          %v916 = vstv %s886
          %v917 = vsub.f32 %v725, %v916
          %v918 = vsub.f32 %v737, %v916
          %v919 = vsub.f32 %v749, %v916
          %v920 = vsub.f32 %v761, %v916
          %v921 = vstv %s905
          %v922 = vmul.f32 %v917, %v921
          %v923 = vmul.f32 %v918, %v921
          %v924 = vmul.f32 %v919, %v921
          %v925 = vmul.f32 %v920, %v921
          %v926 = vlog2.pop %v912
          %v927 = vmul.f32 %v926, 0.6931472
          %v928 = vlog2.pop %v913
          %v929 = vmul.f32 %v928, 0.6931472
          %v930 = vlog2.pop %v914
          %v931 = vmul.f32 %v930, 0.6931472
          %v932 = vlog2.pop %v915
          %v933 = vmul.f32 %v932, 0.6931472
          %v934 = vmax.f32 %v927, -100.0
          %v935 = vmax.f32 %v929, -100.0
          %v936 = vmax.f32 %v931, -100.0
          %v937 = vmax.f32 %v933, -100.0
          %v938 = vsub.f32 1.0, %v912
          %v939 = vsub.f32 1.0, %v913
          %v940 = vsub.f32 1.0, %v914
          %v941 = vsub.f32 1.0, %v915
          %v942 = vlog2.pop %v938
          %v943 = vmul.f32 %v942, 0.6931472
          %v944 = vlog2.pop %v939
          %v945 = vmul.f32 %v944, 0.6931472
          %v946 = vlog2.pop %v940
          %v947 = vmul.f32 %v946, 0.6931472
          %v948 = vlog2.pop %v941
          %v949 = vmul.f32 %v948, 0.6931472
          %v950 = vmax.f32 %v943, -100.0
          %v951 = vmax.f32 %v945, -100.0
          %v952 = vmax.f32 %v947, -100.0
          %v953 = vmax.f32 %v949, -100.0
          %v954 = vmul.f32 %v922, %v934
          %v955 = vmul.f32 %v923, %v935
          %v956 = vmul.f32 %v924, %v936
          %v957 = vmul.f32 %v925, %v937
          %v958 = vsub.f32 1.0, %v922
          %v959 = vsub.f32 1.0, %v923
          %v960 = vsub.f32 1.0, %v924
          %v961 = vsub.f32 1.0, %v925
          %v962 = vmul.f32 %v958, %v950
          %v963 = vmul.f32 %v959, %v951
          %v964 = vmul.f32 %v960, %v952
          %v965 = vmul.f32 %v961, %v953
          %v966 = vadd.f32 %v954, %v962
          %v967 = vadd.f32 %v955, %v963
          %v968 = vadd.f32 %v956, %v964
          %v969 = vadd.f32 %v957, %v965
          %v970 = vsub.f32 0.0, %v966
          %v971 = vsub.f32 0.0, %v967
          %v972 = vsub.f32 0.0, %v968
          %v973 = vsub.f32 0.0, %v969
          %vm974 = vcmask 130048
          %v975 = vsel %vm974, %v970, 0.0
          %v976 = vsel %vm974, %v971, 0.0
          %v977 = vadd.f32 %v975, %v976
          %v978 = vsel %vm974, %v972, 0.0
          %v979 = vadd.f32 %v977, %v978
          %v980 = vsel %vm974, %v973, 0.0
          %v981 = vadd.f32 %v979, %v980
          %982 = vadd.xlane.f32.xlu0 %v981
          %v983 = vpop.xlane.xlu0 %982
          %v984 = vrot.slane %v983, 4
          %v985 = vadd.f32 %v983, %v984
          %v986 = vrot.slane %v985, 2
          %v987 = vadd.f32 %v985, %v986
          %v988 = vrot.slane %v987, 1
          %v989 = vadd.f32 %v987, %v988
          %s990 = vtos %v989
          %s991 = sld [smem:[#allocation3]]
          %s992 = sadd.f32 %s991, %s990
          %s993 = scalar_lea.smem [#allocation3], 0
          %994 = sst [smem:[%s993]] %s992
          // Predicated region
          $region41: #{tpu_custom_call.1} parent=39 // pred_check
            %p995 = pneg %p763
          $region42: #{tpu_custom_call.1} parent=39 // pred_check_branch
            %997 = sbr.rel (%p995) target = $region44
          $region43: #{tpu_custom_call.1} parent=39 // pred_region
            %s998 = smul.f32 %s992, 0.0009765625
            %s999 = scalar_lea.smem [#allocation4], 0
            %1000 = sst [smem:[%s999]] %s998
          $region44: #{tpu_custom_call.1} parent=39 // pred_fallthru
            _
        $region40: #{tpu_custom_call.1} parent=27 // pred_fallthru
          _
        // Predicated region
        $region45: #{tpu_custom_call.1} parent=27 // pred_check
          %p1001 = pneg %p91
        $region46: #{tpu_custom_call.1} parent=27 // pred_check_branch
          %1003 = sbr.rel (%p1001) target = $region48
        $region47: #{tpu_custom_call.1} parent=27 // pred_region
          %1005 = vsyncadd [#allocation5], 0
          %s1007 = sshll.u32 %s2, 4
          %s1008 = int_to_ptr.hbm [resolvable:$true] %s1007
          %1010 = dma.smem_to_hbm [#allocation4], 16, %s1008, [#allocation5]
        $region48: #{tpu_custom_call.1} parent=27 // pred_fallthru
          _
        // Predicated region
        $region49: #{tpu_custom_call.1} parent=27 // pred_check
          %p1011 = pneg %p91
        $region50: #{tpu_custom_call.1} parent=27 // pred_check_branch
          %1013 = sbr.rel (%p1011) target = $region52
        $region51: #{tpu_custom_call.1} parent=27 // pred_region
          %1015 = dma.done [#allocation5], 16
        $region52: #{tpu_custom_call.1} parent=27 // pred_fallthru
          _
        %1016 = sfence
      $region28: #{tpu_custom_call.1} parent=5 // pred_fallthru
        _
      %p1017 = scmp.le.s32.totalorder 2, %s9
      // Predicated region
      $region53: #{tpu_custom_call.1} parent=5 // pred_check
        %p1018 = pneg %p1017
      $region54: #{tpu_custom_call.1} parent=5 // pred_check_branch
        %1020 = sbr.rel (%p1018) target = $region56
      $region55: #{tpu_custom_call.1} parent=5 // pred_region
        %s1021 = ssub.s32 %s9, 2
      $region56: #{tpu_custom_call.1} parent=5 // pred_fallthru
        _
    $region6: #{tpu_custom_call.1} parent=1 // loop_footer
      %s13 = sadd.s32 1, %s9
    $region7: #{tpu_custom_call.1} parent=1 // loop_footer_branch
      %8 = sbr.rel target = $region3
    $region8: #{tpu_custom_call.1} parent=1 // loop_exit
      _
    %1022 = vsyncpa [#allocation5], 1
    %s1023 = scalar_lea.sflag [#allocation5], 1
    %1024 = vsyncpa %s1023, 1

</llo_original>
